<compile_context>
chip_gen: v6e
topology: v6e:2x2x1
jax: 0.10.0
libtpu: 0.0.40
codegen_flags: <defaults>
</compile_context>

<pallas_src>
import jax
import jax.numpy as jnp
from jax.experimental import pallas as pl
from jax.experimental.pallas import tpu as pltpu


def mlp_kernel(x_ref, w1_ref, b1_ref, w2_ref, b2_ref, w3_ref, b3_ref, o_ref):
    # Cast the f32 tile to bf16 for the MXU here (DMA is f32, cast is hidden filler
    # on the VPU since the kernel is MXU-bound).
    xb = x_ref[...].astype(jnp.bfloat16)
    # Layer 1: (TM, D)bf16 @ (D, 128)bf16 -> f32 acc, bias+ReLU in f32 on the VPU.
    h1 = jnp.dot(xb, w1_ref[...], preferred_element_type=jnp.float32)
    h1 = jnp.maximum(h1 + b1_ref[...], 0.0)
    # Layer 2: (TM, 128) @ (128, 64)
    h2 = jnp.dot(h1.astype(jnp.bfloat16), w2_ref[...],
                 preferred_element_type=jnp.float32)
    h2 = jnp.maximum(h2 + b2_ref[...], 0.0)
    # Layer 3: (TM, 64) @ (64, C)
    h3 = jnp.dot(h2.astype(jnp.bfloat16), w3_ref[...],
                 preferred_element_type=jnp.float32)
    o_ref[...] = (h3 + b3_ref[...]).astype(o_ref.dtype)


def _round_up(n, m):
    return (n + m - 1) // m * m


# Per-step VMEM footprint target (fits v5e/v6e/v7x) and the scoped limit we request
# (<= v7x's per-core physical VMEM; raises v5e's 16 MiB scoped default).
_VMEM_SOFT_LIMIT = 24 * 1024 * 1024
_VMEM_LIMIT_BYTES = 32 * 1024 * 1024


def _vmem_footprint(tm, d, c):
    """Rough per-grid-step VMEM bytes: double-buffered tiles + resident weights + temps."""
    x_tiles = 2 * tm * d * 4            # f32 x tile, double buffered
    out_tiles = 2 * tm * c * 4          # f32 out tile, double buffered
    weights = (d * 128 + 128 * 64 + 64 * c) * 2 + (128 + 64 + c) * 4
    temps = tm * (128 + 64) * 4 + tm * (d + 128 + 64) * 2   # f32 h1/h2 + bf16 casts
    return x_tiles + out_tiles + weights + temps


def simple_nn_forward(x, w1, b1, w2, b2, w3, b3, *, block_m=4096):
    """x: (B, D) f32; w*: (in, out) f32; b*: (1, out) f32. Returns (B, C) f32."""
    B, D = x.shape
    C = w3.shape[1]

    # Weights are tiny -> cast once in the wrapper; they stay VMEM-resident as bf16.
    w1b = w1.astype(jnp.bfloat16)
    w2b = w2.astype(jnp.bfloat16)
    w3b = w3.astype(jnp.bfloat16)

    # Batch tile: multiple of 16, large by default to amortize per-step overhead.
    tm = min(block_m, _round_up(B, 16))
    # v7x: keep >= 2 grid steps when the batch is big enough so both TensorCores work.
    if B >= 32:
        tm = min(tm, _round_up((B + 1) // 2, 16))
    # Clamp the tile so the per-step VMEM footprint fits every generation.
    while tm > 16 and _vmem_footprint(tm, D, C) > _VMEM_SOFT_LIMIT:
        tm = max(16, _round_up(tm // 2, 16))

    Bp = _round_up(B, tm)
    if Bp != B:
        # Single pad of the original f32 x (no extra cast pass over x).
        x = jnp.pad(x, ((0, Bp - B), (0, 0)))

    grid = (Bp // tm,)

    # Weights / biases: full-array blocks with constant index_maps -> VMEM-resident.
    resident = lambda a: pl.BlockSpec(a.shape, lambda i: (0,) * a.ndim)

    out_padded = pl.pallas_call(
        mlp_kernel,
        out_shape=jax.ShapeDtypeStruct((Bp, C), jnp.float32),
        grid=grid,
        in_specs=[
            pl.BlockSpec((tm, D), lambda i: (i, 0)),   # x: f32, tiled over batch
            resident(w1b), resident(b1),
            resident(w2b), resident(b2),
            resident(w3b), resident(b3),
        ],
        out_specs=pl.BlockSpec((tm, C), lambda i: (i, 0)),
        compiler_params=pltpu.CompilerParams(
            dimension_semantics=("parallel",),          # shard batch across TCs on v7x
            vmem_limit_bytes=_VMEM_LIMIT_BYTES,
        ),
    )(x, w1b, b1, w2b, b2, w3b, b3)

    return out_padded[:B]


def init_params(key, input_size, num_classes=3):
    # Deterministic init mimicking nn.Linear's uniform(-1/sqrt(fan_in), 1/sqrt(fan_in)).
    def linear(key, fan_in, fan_out):
        kw, kb = jax.random.split(key)
        bound = 1.0 / jnp.sqrt(fan_in)
        # stored as (in, out) so the kernel does x @ W
        w = jax.random.uniform(kw, (fan_in, fan_out), jnp.float32, -bound, bound)
        b = jax.random.uniform(kb, (1, fan_out), jnp.float32, -bound, bound)
        return w, b

    k1, k2, k3 = jax.random.split(key, 3)
    w1, b1 = linear(k1, input_size, 128)
    w2, b2 = linear(k2, 128, 64)
    w3, b3 = linear(k3, 64, num_classes)
    return w1, b1, w2, b2, w3, b3


def _reference(x, w1, b1, w2, b2, w3, b3):
    # Plain-JAX reference with the same bf16 operand casts the kernel uses
    # (accumulation / bias / ReLU in f32), so tolerances can stay tight.
    bf = lambda a: a.astype(jnp.bfloat16).astype(jnp.float32)
    h = jnp.maximum(bf(x) @ bf(w1) + b1, 0.0)
    h = jnp.maximum(bf(h) @ bf(w2) + b2, 0.0)
    return bf(h) @ bf(w3) + b3


if __name__ == "__main__":
    key = jax.random.PRNGKey(0)
    k_x, k_x2, k_p = jax.random.split(key, 3)

    input_size, num_classes = 32, 3
    params = init_params(k_p, input_size, num_classes)

    # Test 1: tiny batch (single grid step).
    batch = 8
    x = jax.random.normal(k_x, (batch, input_size), jnp.float32)
    out = jax.block_until_ready(simple_nn_forward(x, *params))
    ref = _reference(x, *params)
    assert out.shape == (batch, num_classes)
    assert jnp.allclose(out, ref, atol=1e-3, rtol=1e-3), (
        float(jnp.max(jnp.abs(out - ref))))

    # Test 2: B not a multiple of the tile and B > tile (padded multi-step path).
    batch2 = 40
    x2 = jax.random.normal(k_x2, (batch2, input_size), jnp.float32)
    out2 = jax.block_until_ready(simple_nn_forward(x2, *params, block_m=16))
    ref2 = _reference(x2, *params)
    assert out2.shape == (batch2, num_classes)
    assert jnp.allclose(out2, ref2, atol=1e-3, rtol=1e-3), (
        float(jnp.max(jnp.abs(out2 - ref2))))

    print("KERNEL_OK")
</pallas_src>

<mosaic_0001>
module attributes {stable_mosaic.version = 11 : i64} {
  func.func @mlp_kernel(%arg0: i32, %arg1: memref<16x32xf32, #tpu.memory_space<vmem>>, %arg2: memref<32x128xbf16, #tpu.memory_space<vmem>>, %arg3: memref<1x128xf32, #tpu.memory_space<vmem>>, %arg4: memref<128x64xbf16, #tpu.memory_space<vmem>>, %arg5: memref<1x64xf32, #tpu.memory_space<vmem>>, %arg6: memref<64x3xbf16, #tpu.memory_space<vmem>>, %arg7: memref<1x3xf32, #tpu.memory_space<vmem>>, %arg8: memref<16x3xf32, #tpu.memory_space<vmem>>) attributes {dimension_semantics = [#tpu.dimension_semantics<parallel>], iteration_bounds = array<i64: 1>, scalar_prefetch = 0 : i64, scratch_operands = 0 : i64, tpu.core_type = #tpu.core_type<tc>, window_params = [{transform_indices = @transform_0, window_bounds = array<i64: 16, 32>}, {pipeline_mode = #tpu.pipeline_mode<synchronous>, transform_indices = @transform_1, window_bounds = array<i64: 32, 128>}, {pipeline_mode = #tpu.pipeline_mode<synchronous>, transform_indices = @transform_2, window_bounds = array<i64: 1, 128>}, {pipeline_mode = #tpu.pipeline_mode<synchronous>, transform_indices = @transform_3, window_bounds = array<i64: 128, 64>}, {pipeline_mode = #tpu.pipeline_mode<synchronous>, transform_indices = @transform_4, window_bounds = array<i64: 1, 64>}, {pipeline_mode = #tpu.pipeline_mode<synchronous>, transform_indices = @transform_5, window_bounds = array<i64: 64, 3>}, {pipeline_mode = #tpu.pipeline_mode<synchronous>, transform_indices = @transform_6, window_bounds = array<i64: 1, 3>}, {transform_indices = @transform_7, window_bounds = array<i64: 16, 3>}]} {
    %c0 = arith.constant 0 : index
    %c0_0 = arith.constant 0 : index
    %0 = vector.load %arg1[%c0, %c0_0] : memref<16x32xf32, #tpu.memory_space<vmem>>, vector<16x32xf32>
    %1 = arith.truncf %0 : vector<16x32xf32> to vector<16x32xbf16>
    %c0_1 = arith.constant 0 : index
    %c0_2 = arith.constant 0 : index
    %2 = vector.load %arg2[%c0_1, %c0_2] : memref<32x128xbf16, #tpu.memory_space<vmem>>, vector<32x128xbf16>
    %cst = arith.constant dense<0.000000e+00> : vector<16x128xf32>
    %3 = tpu.matmul %1, %2, %cst {dimension_numbers = #tpu.dot_dimension_numbers<[1], [0], [0], [1], [0, 0, 1, 1], [], []>} : vector<16x32xbf16>, vector<32x128xbf16>, vector<16x128xf32> -> vector<16x128xf32>
    %c0_3 = arith.constant 0 : index
    %c0_4 = arith.constant 0 : index
    %4 = vector.load %arg3[%c0_3, %c0_4] : memref<1x128xf32, #tpu.memory_space<vmem>>, vector<1x128xf32>
    %5 = vector.broadcast %4 : vector<1x128xf32> to vector<16x128xf32>
    %6 = arith.addf %3, %5 : vector<16x128xf32>
    %cst_5 = arith.constant 0.000000e+00 : f32
    %7 = vector.broadcast %cst_5 : f32 to vector<16x128xf32>
    %8 = arith.maximumf %6, %7 : vector<16x128xf32>
    %9 = arith.truncf %8 : vector<16x128xf32> to vector<16x128xbf16>
    %c0_6 = arith.constant 0 : index
    %c0_7 = arith.constant 0 : index
    %10 = vector.load %arg4[%c0_6, %c0_7] : memref<128x64xbf16, #tpu.memory_space<vmem>>, vector<128x64xbf16>
    %cst_8 = arith.constant dense<0.000000e+00> : vector<16x64xf32>
    %11 = tpu.matmul %9, %10, %cst_8 {dimension_numbers = #tpu.dot_dimension_numbers<[1], [0], [0], [1], [0, 0, 1, 1], [], []>} : vector<16x128xbf16>, vector<128x64xbf16>, vector<16x64xf32> -> vector<16x64xf32>
    %c0_9 = arith.constant 0 : index
    %c0_10 = arith.constant 0 : index
    %12 = vector.load %arg5[%c0_9, %c0_10] : memref<1x64xf32, #tpu.memory_space<vmem>>, vector<1x64xf32>
    %13 = vector.broadcast %12 : vector<1x64xf32> to vector<16x64xf32>
    %14 = arith.addf %11, %13 : vector<16x64xf32>
    %cst_11 = arith.constant 0.000000e+00 : f32
    %15 = vector.broadcast %cst_11 : f32 to vector<16x64xf32>
    %16 = arith.maximumf %14, %15 : vector<16x64xf32>
    %17 = arith.truncf %16 : vector<16x64xf32> to vector<16x64xbf16>
    %c0_12 = arith.constant 0 : index
    %c0_13 = arith.constant 0 : index
    %18 = vector.load %arg6[%c0_12, %c0_13] : memref<64x3xbf16, #tpu.memory_space<vmem>>, vector<64x3xbf16>
    %cst_14 = arith.constant dense<0.000000e+00> : vector<16x3xf32>
    %19 = tpu.matmul %17, %18, %cst_14 {dimension_numbers = #tpu.dot_dimension_numbers<[1], [0], [0], [1], [0, 0, 1, 1], [], []>} : vector<16x64xbf16>, vector<64x3xbf16>, vector<16x3xf32> -> vector<16x3xf32>
    %c0_15 = arith.constant 0 : index
    %c0_16 = arith.constant 0 : index
    %20 = vector.load %arg7[%c0_15, %c0_16] : memref<1x3xf32, #tpu.memory_space<vmem>>, vector<1x3xf32>
    %21 = vector.broadcast %20 : vector<1x3xf32> to vector<16x3xf32>
    %22 = arith.addf %19, %21 : vector<16x3xf32>
    %c0_17 = arith.constant 0 : index
    %c0_18 = arith.constant 0 : index
    %23 = vector.load %arg8[%c0_17, %c0_18] : memref<16x3xf32, #tpu.memory_space<vmem>>, vector<16x3xf32>
    tpu.vector_store %arg8[%c0_17, %c0_18], %22 {strides = array<i32>} : memref<16x3xf32, #tpu.memory_space<vmem>>, vector<16x3xf32>,
    return
  }
  func.func @transform_0(%arg0: i32) -> (i32, i32) {
    %c0_i32 = arith.constant 0 : i32
    %c0_i32_0 = arith.constant 0 : i32
    return %arg0, %c0_i32 : i32, i32
  }
  func.func @transform_1(%arg0: i32) -> (i32, i32) {
    %c0_i32 = arith.constant 0 : i32
    %c0_i32_0 = arith.constant 0 : i32
    %c0_i32_1 = arith.constant 0 : i32
    return %c0_i32, %c0_i32_0 : i32, i32
  }
  func.func @transform_2(%arg0: i32) -> (i32, i32) {
    %c0_i32 = arith.constant 0 : i32
    %c0_i32_0 = arith.constant 0 : i32
    %c0_i32_1 = arith.constant 0 : i32
    return %c0_i32, %c0_i32_0 : i32, i32
  }
  func.func @transform_3(%arg0: i32) -> (i32, i32) {
    %c0_i32 = arith.constant 0 : i32
    %c0_i32_0 = arith.constant 0 : i32
    %c0_i32_1 = arith.constant 0 : i32
    return %c0_i32, %c0_i32_0 : i32, i32
  }
  func.func @transform_4(%arg0: i32) -> (i32, i32) {
    %c0_i32 = arith.constant 0 : i32
    %c0_i32_0 = arith.constant 0 : i32
    %c0_i32_1 = arith.constant 0 : i32
    return %c0_i32, %c0_i32_0 : i32, i32
  }
  func.func @transform_5(%arg0: i32) -> (i32, i32) {
    %c0_i32 = arith.constant 0 : i32
    %c0_i32_0 = arith.constant 0 : i32
    %c0_i32_1 = arith.constant 0 : i32
    return %c0_i32, %c0_i32_0 : i32, i32
  }
  func.func @transform_6(%arg0: i32) -> (i32, i32) {
    %c0_i32 = arith.constant 0 : i32
    %c0_i32_0 = arith.constant 0 : i32
    %c0_i32_1 = arith.constant 0 : i32
    return %c0_i32, %c0_i32_0 : i32, i32
  }
  func.func @transform_7(%arg0: i32) -> (i32, i32) {
    %c0_i32 = arith.constant 0 : i32
    %c0_i32_0 = arith.constant 0 : i32
    return %arg0, %c0_i32 : i32, i32
  }
}

</mosaic_0001>

<llo_original>
// kernel: tpu_custom_call.1
$region0: #{tpu_custom_call.1}
  #allocation0 [shape = 'u32[]', space=smem, size = 0x4, offset = 0x4, fixed_abs, tag = 'smem constant byte address 0x4 - core index']
  #allocation1 [shape = 'u32[144,128]{1,0:T(1,128)}', space=vmem, size = 0x12000, scoped, tag = 'internal scratch']
  %s0 = inlined_call_operand.vmem [shape: f32[16,32], index: 0, kind: input, shape index: {}]
  %s1 = inlined_call_operand.vmem [shape: bf16[32,128], index: 1, kind: input, shape index: {}]
  %s2 = inlined_call_operand.vmem [shape: f32[1,128], index: 2, kind: input, shape index: {}]
  %s3 = inlined_call_operand.vmem [shape: bf16[128,64], index: 3, kind: input, shape index: {}]
  %s4 = inlined_call_operand.vmem [shape: f32[1,64], index: 4, kind: input, shape index: {}]
  %s5 = inlined_call_operand.vmem [shape: bf16[64,3], index: 5, kind: input, shape index: {}]
  %s6 = inlined_call_operand.vmem [shape: f32[1,3], index: 6, kind: input, shape index: {}]
  %s7 = inlined_call_operand.vmem [shape: f32[16,3], index: 7, kind: output, shape index: {}]
  %s8 = sld [smem:[#allocation0]]
  $region38: #{tpu_custom_call.1} parent=0
    _
  %s10 = ssub.s32 1, %s8
  %s11 = scalar_select 0, %s10, %s8
  // Predicated region
  $region2: #{tpu_custom_call.1} parent=0 // pred_check
    _
  $region3: #{tpu_custom_call.1} parent=0 // pred_check_branch
    %13 = sbr.rel (0) target = $region5
  $region4: #{tpu_custom_call.1} parent=0 // pred_region
    _
  $region5: #{tpu_custom_call.1} parent=0 // pred_fallthru
    _
  // Predicated region
  $region6: #{tpu_custom_call.1} parent=0 // pred_check
    _
  $region7: #{tpu_custom_call.1} parent=0 // pred_check_branch
    %15 = sbr.rel (0) target = $region9
  $region8: #{tpu_custom_call.1} parent=0 // pred_region
    _
  $region9: #{tpu_custom_call.1} parent=0 // pred_fallthru
    _
  // Predicated region
  $region10: #{tpu_custom_call.1} parent=0 // pred_check
    _
  $region11: #{tpu_custom_call.1} parent=0 // pred_check_branch
    %17 = sbr.rel (0) target = $region13
  $region12: #{tpu_custom_call.1} parent=0 // pred_region
    _
  $region13: #{tpu_custom_call.1} parent=0 // pred_fallthru
    _
  // Predicated region
  $region14: #{tpu_custom_call.1} parent=0 // pred_check
    _
  $region15: #{tpu_custom_call.1} parent=0 // pred_check_branch
    %19 = sbr.rel (0) target = $region17
  $region16: #{tpu_custom_call.1} parent=0 // pred_region
    _
  $region17: #{tpu_custom_call.1} parent=0 // pred_fallthru
    _
  // Predicated region
  $region18: #{tpu_custom_call.1} parent=0 // pred_check
    _
  $region19: #{tpu_custom_call.1} parent=0 // pred_check_branch
    %21 = sbr.rel (0) target = $region21
  $region20: #{tpu_custom_call.1} parent=0 // pred_region
    _
  $region21: #{tpu_custom_call.1} parent=0 // pred_fallthru
    _
  // Predicated region
  $region22: #{tpu_custom_call.1} parent=0 // pred_check
    _
  $region23: #{tpu_custom_call.1} parent=0 // pred_check_branch
    %23 = sbr.rel (0) target = $region25
  $region24: #{tpu_custom_call.1} parent=0 // pred_region
    _
  $region25: #{tpu_custom_call.1} parent=0 // pred_fallthru
    _
  // Predicated region
  $region26: #{tpu_custom_call.1} parent=0 // pred_check
    _
  $region27: #{tpu_custom_call.1} parent=0 // pred_check_branch
    %25 = sbr.rel (0) target = $region29
  $region28: #{tpu_custom_call.1} parent=0 // pred_region
    _
  $region29: #{tpu_custom_call.1} parent=0 // pred_fallthru
    _
  %v27 = vld [vmem:[%s0] sm:$0xff]
  %v28 = vld [vmem:[%s0 + $0x8] sm:$0xff]
  %v29 = vpack.c.bf16 %v28, %v27
  %v30 = vld [vmem:[%s1] sm:$0xf]
  %v31 = vld [vmem:[%s1 + $0x4] sm:$0xf]
  %v32 = vld [vmem:[%s1 + $0x8] sm:$0xf]
  %v33 = vld [vmem:[%s1 + $0xc] sm:$0xf]
  %v34 = vld [vmem:[%s2] sm:$0x1]
  %v36 = vlaneseq
  %v37 = vshrl.u32 %v36, 7
  %v38 = vsub.s32 0, %v37
  %v39 = vrot.slane %v34, %v38
  %v45 = vunpack.c.l.b16 %v30
  %v46 = vunpack.c.l.b16 %v31
  %v47 = vunpack.c.l.b16 %v32
  %v48 = vunpack.c.l.b16 %v33
  %v49 = vpack.c.b16 %v46, %v45
  %v50 = vpack.c.b16 %v48, %v47
  %vm53 = vcmask 261120
  %v55 = vsel %vm53, %v29, 0
  %57 = vmatprep.subr.bf16.mxu0 0
  %58 = vmatpush1.bf16.msra.mxu0 0
  %59 = vmatprep.subr.bf16.mxu0 0
  %60 = vmatpush1.bf16.msra.mxu0 0
  %61 = vmatprep.subr.bf16.mxu0 0
  %62 = vmatpush1.bf16.msra.mxu0 0
  %63 = vmatprep.subr.bf16.mxu0 0
  %64 = vmatpush1.bf16.msra.mxu0 0
  %65 = vmatprep.subr.bf16.mxu0 0
  %66 = vmatpush1.bf16.msra.mxu0 0
  %67 = vmatprep.subr.bf16.mxu0 0
  %68 = vmatpush1.bf16.msra.mxu0 0
  %69 = vmatprep.subr.bf16.mxu0 0
  %70 = vmatpush1.bf16.msra.mxu0 %v50
  %71 = vmatprep.subr.bf16.mxu0 0
  %72 = vmatpush1.bf16.msra.mxu0 %v49
  %73 = vmatprep.subr.bf16.mxu0 0
  %74 = vmatpush2.bf16.msra.mxu0 0
  %75 = vmatprep.subr.bf16.mxu0 0
  %76 = vmatpush2.bf16.msra.mxu0 0
  %77 = vmatprep.subr.bf16.mxu0 0
  %78 = vmatpush2.bf16.msra.mxu0 0
  %79 = vmatprep.subr.bf16.mxu0 0
  %80 = vmatpush2.bf16.msra.mxu0 0
  %81 = vmatprep.subr.bf16.mxu0 0
  %82 = vmatpush2.bf16.msra.mxu0 0
  %83 = vmatprep.subr.bf16.mxu0 0
  %84 = vmatpush2.bf16.msra.mxu0 0
  %85 = vmatprep.subr.bf16.mxu0 0
  %86 = vmatpush2.bf16.msra.mxu0 0
  %87 = vmatprep.subr.bf16.mxu0 0
  %88 = vmatpush2.bf16.msra.mxu0 0
  %89 = vmatprep.mubr.bf16.mxu0 0
  %90 = vmatmul.mubr.bf16.gmra.mxu0 %v55
  %v91 = vpop.f32.mrf.mxu0
  %v92 = vadd.f32 %v39, %v91
  %v93 = vpop.f32.mrf.mxu0
  %v94 = vpop.f32.mrf.mxu0
  %v95 = vadd.f32 %v39, %v94
  %v96 = vpop.f32.mrf.mxu0
  %97 = vdwg.mxu0
  %v98 = vmax.f32 %v92, 0.0
  %v99 = vmax.f32 %v95, 0.0
  %v100 = vpack.c.bf16 %v99, %v98
  %v101 = vld [vmem:[%s3] sm:$0xf]
  %v102 = vld [vmem:[%s3 + $0x4] sm:$0xf]
  %v103 = vld [vmem:[%s3 + $0x8] sm:$0xf]
  %v104 = vld [vmem:[%s3 + $0xc] sm:$0xf]
  %v105 = vld [vmem:[%s3 + $0x10] sm:$0xf]
  %v106 = vld [vmem:[%s3 + $0x14] sm:$0xf]
  %v107 = vld [vmem:[%s3 + $0x18] sm:$0xf]
  %v108 = vld [vmem:[%s3 + $0x1c] sm:$0xf]
  %v109 = vld [vmem:[%s3 + $0x20] sm:$0xf]
  %v110 = vld [vmem:[%s3 + $0x24] sm:$0xf]
  %v111 = vld [vmem:[%s3 + $0x28] sm:$0xf]
  %v112 = vld [vmem:[%s3 + $0x2c] sm:$0xf]
  %v113 = vld [vmem:[%s3 + $0x30] sm:$0xf]
  %v114 = vld [vmem:[%s3 + $0x34] sm:$0xf]
  %v115 = vld [vmem:[%s3 + $0x38] sm:$0xf]
  %v116 = vld [vmem:[%s3 + $0x3c] sm:$0xf]
  %v117 = vld [vmem:[%s4] sm:$0x1]
  %v119 = vlaneseq
  %v120 = vshrl.u32 %v119, 7
  %v121 = vsub.s32 0, %v120
  %v122 = vrot.slane %v117, %v121
  %v140 = vunpack.c.l.b16 %v101
  %v141 = vunpack.c.l.b16 %v102
  %v142 = vunpack.c.l.b16 %v103
  %v143 = vunpack.c.l.b16 %v104
  %v144 = vunpack.c.l.b16 %v105
  %v145 = vunpack.c.l.b16 %v106
  %v146 = vunpack.c.l.b16 %v107
  %v147 = vunpack.c.l.b16 %v108
  %v148 = vunpack.c.l.b16 %v109
  %v149 = vunpack.c.l.b16 %v110
  %v150 = vunpack.c.l.b16 %v111
  %v151 = vunpack.c.l.b16 %v112
  %v152 = vunpack.c.l.b16 %v113
  %v153 = vunpack.c.l.b16 %v114
  %v154 = vunpack.c.l.b16 %v115
  %v155 = vunpack.c.l.b16 %v116
  %v156 = vpack.c.b16 %v141, %v140
  %v157 = vpack.c.b16 %v143, %v142
  %v158 = vpack.c.b16 %v145, %v144
  %v159 = vpack.c.b16 %v147, %v146
  %v160 = vpack.c.b16 %v149, %v148
  %v161 = vpack.c.b16 %v151, %v150
  %v162 = vpack.c.b16 %v153, %v152
  %v163 = vpack.c.b16 %v155, %v154
  %172 = vmatprep.subr.bf16.mxu0 0
  %173 = vmatpush1.bf16.msra.mxu0 %v163
  %174 = vmatprep.subr.bf16.mxu0 0
  %175 = vmatpush1.bf16.msra.mxu0 %v162
  %176 = vmatprep.subr.bf16.mxu0 0
  %177 = vmatpush1.bf16.msra.mxu0 %v161
  %178 = vmatprep.subr.bf16.mxu0 0
  %179 = vmatpush1.bf16.msra.mxu0 %v160
  %180 = vmatprep.subr.bf16.mxu0 0
  %181 = vmatpush1.bf16.msra.mxu0 %v159
  %182 = vmatprep.subr.bf16.mxu0 0
  %183 = vmatpush1.bf16.msra.mxu0 %v158
  %184 = vmatprep.subr.bf16.mxu0 0
  %185 = vmatpush1.bf16.msra.mxu0 %v157
  %186 = vmatprep.subr.bf16.mxu0 0
  %187 = vmatpush1.bf16.msra.mxu0 %v156
  %188 = vmatprep.subr.bf16.mxu0 0
  %189 = vmatpush2.bf16.msra.mxu0 0
  %190 = vmatprep.subr.bf16.mxu0 0
  %191 = vmatpush2.bf16.msra.mxu0 0
  %192 = vmatprep.subr.bf16.mxu0 0
  %193 = vmatpush2.bf16.msra.mxu0 0
  %194 = vmatprep.subr.bf16.mxu0 0
  %195 = vmatpush2.bf16.msra.mxu0 0
  %196 = vmatprep.subr.bf16.mxu0 0
  %197 = vmatpush2.bf16.msra.mxu0 0
  %198 = vmatprep.subr.bf16.mxu0 0
  %199 = vmatpush2.bf16.msra.mxu0 0
  %200 = vmatprep.subr.bf16.mxu0 0
  %201 = vmatpush2.bf16.msra.mxu0 0
  %202 = vmatprep.subr.bf16.mxu0 0
  %203 = vmatpush2.bf16.msra.mxu0 0
  %204 = vmatprep.mubr.bf16.mxu0 0
  %205 = vmatmul.mubr.bf16.gmra.mxu0 %v100
  %v206 = vpop.f32.mrf.mxu0
  %v207 = vadd.f32 %v122, %v206
  %v208 = vpop.f32.mrf.mxu0
  %v209 = vpop.f32.mrf.mxu0
  %v210 = vadd.f32 %v122, %v209
  %v211 = vpop.f32.mrf.mxu0
  %212 = vdwg.mxu0
  %v213 = vmax.f32 %v207, 0.0
  %v214 = vmax.f32 %v210, 0.0
  %v215 = vpack.c.bf16 %v214, %v213
  %v216 = vld [vmem:[%s5] sm:$0xf]
  %v217 = vld [vmem:[%s5 + $0x4] sm:$0xf]
  %v218 = vld [vmem:[%s5 + $0x8] sm:$0xf]
  %v219 = vld [vmem:[%s5 + $0xc] sm:$0xf]
  %v220 = vld [vmem:[%s5 + $0x10] sm:$0xf]
  %v221 = vld [vmem:[%s5 + $0x14] sm:$0xf]
  %v222 = vld [vmem:[%s5 + $0x18] sm:$0xf]
  %v223 = vld [vmem:[%s5 + $0x1c] sm:$0xf]
  %v224 = vld [vmem:[%s6] sm:$0x1]
  %v226 = vlaneseq
  %v227 = vshrl.u32 %v226, 7
  %v228 = vsub.s32 0, %v227
  %v229 = vrot.slane %v224, %v228
  %v239 = vunpack.c.l.b16 %v216
  %v240 = vunpack.c.l.b16 %v217
  %v241 = vunpack.c.l.b16 %v218
  %v242 = vunpack.c.l.b16 %v219
  %v243 = vunpack.c.l.b16 %v220
  %v244 = vunpack.c.l.b16 %v221
  %v245 = vunpack.c.l.b16 %v222
  %v246 = vunpack.c.l.b16 %v223
  %v247 = vpack.c.b16 %v240, %v239
  %v248 = vpack.c.b16 %v242, %v241
  %v249 = vpack.c.b16 %v244, %v243
  %v250 = vpack.c.b16 %v246, %v245
  %vm255 = vcmask 523264
  %v257 = vsel %vm255, %v215, 0
  %259 = vmatprep.subr.bf16.mxu0 0
  %260 = vmatpush1.bf16.msra.mxu0 0
  %261 = vmatprep.subr.bf16.mxu0 0
  %262 = vmatpush1.bf16.msra.mxu0 0
  %263 = vmatprep.subr.bf16.mxu0 0
  %264 = vmatpush1.bf16.msra.mxu0 0
  %265 = vmatprep.subr.bf16.mxu0 0
  %266 = vmatpush1.bf16.msra.mxu0 0
  %267 = vmatprep.subr.bf16.mxu0 0
  %268 = vmatpush1.bf16.msra.mxu0 %v250
  %269 = vmatprep.subr.bf16.mxu0 0
  %270 = vmatpush1.bf16.msra.mxu0 %v249
  %271 = vmatprep.subr.bf16.mxu0 0
  %272 = vmatpush1.bf16.msra.mxu0 %v248
  %273 = vmatprep.subr.bf16.mxu0 0
  %274 = vmatpush1.bf16.msra.mxu0 %v247
  %275 = vmatprep.subr.bf16.mxu0 0
  %276 = vmatpush2.bf16.msra.mxu0 0
  %277 = vmatprep.subr.bf16.mxu0 0
  %278 = vmatpush2.bf16.msra.mxu0 0
  %279 = vmatprep.subr.bf16.mxu0 0
  %280 = vmatpush2.bf16.msra.mxu0 0
  %281 = vmatprep.subr.bf16.mxu0 0
  %282 = vmatpush2.bf16.msra.mxu0 0
  %283 = vmatprep.subr.bf16.mxu0 0
  %284 = vmatpush2.bf16.msra.mxu0 0
  %285 = vmatprep.subr.bf16.mxu0 0
  %286 = vmatpush2.bf16.msra.mxu0 0
  %287 = vmatprep.subr.bf16.mxu0 0
  %288 = vmatpush2.bf16.msra.mxu0 0
  %289 = vmatprep.subr.bf16.mxu0 0
  %290 = vmatpush2.bf16.msra.mxu0 0
  %291 = vmatprep.mubr.bf16.mxu0 0
  %292 = vmatmul.mubr.bf16.gmra.mxu0 %v257
  %v293 = vpop.f32.mrf.mxu0
  %v294 = vadd.f32 %v229, %v293
  %v295 = vpop.f32.mrf.mxu0
  %v296 = vpop.f32.mrf.mxu0
  %v297 = vadd.f32 %v229, %v296
  %v298 = vpop.f32.mrf.mxu0
  %299 = vdwg.mxu0
  %vm300 = vcmask 23552
  %301 = vst.msk [vmem:[%s7] sm:$0xff] %vm300, %v294
  %302 = vst.msk [vmem:[%s7 + $0x8] sm:$0xff] %vm300, %v297
  // Predicated region
  $region30: #{tpu_custom_call.1} parent=0 // pred_check
    _
  $region31: #{tpu_custom_call.1} parent=0 // pred_check_branch
    %304 = sbr.rel (0) target = $region33
  $region32: #{tpu_custom_call.1} parent=0 // pred_region
    _
  $region33: #{tpu_custom_call.1} parent=0 // pred_fallthru
    _
  // Predicated region
  $region34: #{tpu_custom_call.1} parent=0 // pred_check
    _
  $region35: #{tpu_custom_call.1} parent=0 // pred_check_branch
    %306 = sbr.rel (0) target = $region37
  $region36: #{tpu_custom_call.1} parent=0 // pred_region
    _
  $region37: #{tpu_custom_call.1} parent=0 // pred_fallthru
    _

</llo_original>
